<compile_context>
chip_gen: v7x
topology: tpu7x:2x2x1
jax: 0.10.0
libtpu: 0.0.40
codegen_flags: <defaults>
</compile_context>

<pallas_src>
import functools
import math

import jax
import jax.numpy as jnp
from jax.experimental import pallas as pl
from jax.experimental.pallas import tpu as pltpu

_SMEM = pltpu.MemorySpace.SMEM
_LANE = 128
_VMEM_LIMIT = 32 * 1024 * 1024     # safe on v5e/v6e (128 MiB) and v7x (64 MiB)


# ----------------------------------------------------------------------------
# small helpers: lane tiling + padding to a multiple of the lane tile
# ----------------------------------------------------------------------------
def _round_up(x, m):
    return (x + m - 1) // m * m


def _lane_tiling(n, max_tile=1024):
    """Pick a lane tile (multiple of 128, <= max_tile) and padded extent."""
    tile = min(max_tile, _round_up(max(n, 1), _LANE))
    return tile, _round_up(max(n, 1), tile)


def _pad_lanes(arr, n_pad, value=0.0):
    pad = n_pad - arr.shape[-1]
    if pad == 0:
        return arr
    widths = [(0, 0)] * (arr.ndim - 1) + [(0, pad)]
    return jnp.pad(arr, widths, constant_values=value)


def _row(t, n_pad):
    """[N] / [N,1] time vector -> lane-dense padded [1, n_pad] f32 row."""
    return _pad_lanes(jnp.reshape(t, (1, -1)).astype(jnp.float32), n_pad)


# ----------------------------------------------------------------------------
# get_k_params: pure python helper (no tensors), reproduced verbatim.
# ----------------------------------------------------------------------------
def get_k_params(bins):
    list_c, list_l, list_r = [], [], []
    for k in range(1, int(bins + 1)):
        k_c = (2 * k - 1) / bins - 1
        list_c.append(k_c)
        list_l.append(k_c - 1 / bins)
        list_r.append(k_c + 1 / bins)
    return list_c, list_l, list_r


# ----------------------------------------------------------------------------
# continuous_var_bayesian_flow (n_samples == 1)
#   gamma = 1 - sigma1 ** (2 t)
#   mu    = gamma * x + eps * sqrt(gamma * (1 - gamma))
# Layout: xT/epsT/muT are [D, N] (lane axis = N), gamma is a [1, N] row.
# ----------------------------------------------------------------------------
def _cont_flow_kernel(t_ref, x_ref, eps_ref, mu_ref, gamma_ref, *, log_s1):
    t = t_ref[...]                                       # [1, tile]
    gamma = 1.0 - jnp.exp((2.0 * log_s1) * t)            # 1 - sigma1**(2t)
    mu_ref[...] = gamma * x_ref[...] + eps_ref[...] * jnp.sqrt(gamma * (1.0 - gamma))
    gamma_ref[...] = gamma


def continuous_var_bayesian_flow(t, sigma1, x, eps, max_tile=1024):
    N, D = x.shape
    tile, n_pad = _lane_tiling(N, max_tile)
    t_row = _row(t, n_pad)
    xT = _pad_lanes(jnp.transpose(x).astype(jnp.float32), n_pad)
    epsT = _pad_lanes(jnp.transpose(eps).astype(jnp.float32), n_pad)
    muT, gammaR = pl.pallas_call(
        functools.partial(_cont_flow_kernel, log_s1=math.log(float(sigma1))),
        grid=(n_pad // tile,),
        in_specs=[
            pl.BlockSpec((1, tile), lambda i: (0, i)),     # t
            pl.BlockSpec((D, tile), lambda i: (0, i)),     # x^T
            pl.BlockSpec((D, tile), lambda i: (0, i)),     # eps^T
        ],
        out_specs=[
            pl.BlockSpec((D, tile), lambda i: (0, i)),     # mu^T
            pl.BlockSpec((1, tile), lambda i: (0, i)),     # gamma row
        ],
        out_shape=[
            jax.ShapeDtypeStruct((D, n_pad), jnp.float32),
            jax.ShapeDtypeStruct((1, n_pad), jnp.float32),
        ],
        compiler_params=pltpu.CompilerParams(
            dimension_semantics=("parallel",), vmem_limit_bytes=_VMEM_LIMIT),
    )(t_row, xT, epsT)
    mu = jnp.transpose(muT[:, :N])
    gamma = jnp.transpose(gammaR[:, :N])                   # [N, 1], like torch
    return mu, gamma


# ----------------------------------------------------------------------------
# discrete_var_bayesian_flow
#   beta = beta1 * t^2 ; y = beta*(K*x - 1) + sqrt(beta*K)*eps ; theta = softmax(y)
# Layout: [K, N]; softmax over the (small) sublane class axis, lanes stay dense.
# ----------------------------------------------------------------------------
def _disc_flow_kernel(t_ref, x_ref, eps_ref, theta_ref, *, K, beta1):
    t = t_ref[...]                                       # [1, tile]
    beta = beta1 * t * t
    y = beta * (K * x_ref[...] - 1.0) + jnp.sqrt(beta * K) * eps_ref[...]
    y = y - jnp.max(y, axis=0, keepdims=True)            # stable softmax over K
    e = jnp.exp(y)
    theta_ref[...] = e * pl.reciprocal(jnp.sum(e, axis=0, keepdims=True))


def discrete_var_bayesian_flow(t, beta1, x, K, eps, max_tile=1024):
    N, Kdim = x.shape
    assert Kdim == K
    tile, n_pad = _lane_tiling(N, max_tile)
    t_row = _row(t, n_pad)
    xT = _pad_lanes(jnp.transpose(x).astype(jnp.float32), n_pad)
    epsT = _pad_lanes(jnp.transpose(eps).astype(jnp.float32), n_pad)
    thetaT = pl.pallas_call(
        functools.partial(_disc_flow_kernel, K=float(K), beta1=float(beta1)),
        grid=(n_pad // tile,),
        in_specs=[
            pl.BlockSpec((1, tile), lambda i: (0, i)),
            pl.BlockSpec((K, tile), lambda i: (0, i)),
            pl.BlockSpec((K, tile), lambda i: (0, i)),
        ],
        out_specs=pl.BlockSpec((K, tile), lambda i: (0, i)),
        out_shape=jax.ShapeDtypeStruct((K, n_pad), jnp.float32),
        compiler_params=pltpu.CompilerParams(
            dimension_semantics=("parallel",), vmem_limit_bytes=_VMEM_LIMIT),
    )(t_row, xT, epsT)
    return jnp.transpose(thetaT[:, :N])


# ----------------------------------------------------------------------------
# ctime4continuous_loss
#   loss_n = -log(sigma1) * sum_d (x_pred - x)^2 * sigma1^(-2 t_n)
# Layout: [D, N]; per-row loss emitted as a lane-dense [1, N] row.
# ----------------------------------------------------------------------------
def _ctime_cont_loss_kernel(t_ref, xp_ref, x_ref, loss_ref, *, log_s1):
    diff = xp_ref[...] - x_ref[...]
    sq = jnp.sum(diff * diff, axis=0, keepdims=True)               # [1, tile]
    loss_ref[...] = (-log_s1) * sq * jnp.exp((-2.0 * log_s1) * t_ref[...])


def ctime4continuous_loss(t, sigma1, x_pred, x, max_tile=1024):
    N, D = x.shape
    tile, n_pad = _lane_tiling(N, max_tile)
    t_row = _row(t, n_pad)
    xpT = _pad_lanes(jnp.transpose(x_pred).astype(jnp.float32), n_pad)
    xT = _pad_lanes(jnp.transpose(x).astype(jnp.float32), n_pad)
    out = pl.pallas_call(
        functools.partial(_ctime_cont_loss_kernel, log_s1=math.log(float(sigma1))),
        grid=(n_pad // tile,),
        in_specs=[
            pl.BlockSpec((1, tile), lambda i: (0, i)),
            pl.BlockSpec((D, tile), lambda i: (0, i)),
            pl.BlockSpec((D, tile), lambda i: (0, i)),
        ],
        out_specs=pl.BlockSpec((1, tile), lambda i: (0, i)),
        out_shape=jax.ShapeDtypeStruct((1, n_pad), jnp.float32),
        compiler_params=pltpu.CompilerParams(
            dimension_semantics=("parallel",), vmem_limit_bytes=_VMEM_LIMIT),
    )(t_row, xpT, xT)
    return out[0, :N]                                              # [N]


# Same math as ctime4continuous_loss in the reference module.
ctime4discreteised_loss = ctime4continuous_loss


# ----------------------------------------------------------------------------
# ctime4discrete_loss
#   L_inf = K * beta1 * t_n * sum_k (e_x - e_hat)^2 ; return mean over n
# Tiled reduction: "arbitrary" row-tile axis, (1,1) VMEM scalar accumulator,
# init at pid==0, divide-by-N + store at the last step.
# ----------------------------------------------------------------------------
def _ctime_disc_loss_kernel(t_ref, ex_ref, eh_ref, out_ref, acc_ref, *,
                            K, beta1, n_rows):
    @pl.when(pl.program_id(0) == 0)
    def _():
        acc_ref[...] = jnp.zeros_like(acc_ref)

    diff = ex_ref[...] - eh_ref[...]
    row = jnp.sum(diff * diff, axis=0, keepdims=True)              # [1, tile]
    L = (K * beta1) * t_ref[...] * row
    acc_ref[...] += jnp.sum(L, axis=1, keepdims=True)              # (1, 1)

    @pl.when(pl.program_id(0) == pl.num_programs(0) - 1)
    def _():
        out_ref[...] = acc_ref[...] / n_rows


def ctime4discrete_loss(t, beta1, one_hot_x, p_0, K, max_tile=1024):
    N, Kdim = one_hot_x.shape
    assert Kdim == K
    tile, n_pad = _lane_tiling(N, max_tile)
    t_row = _row(t, n_pad)
    exT = _pad_lanes(jnp.transpose(one_hot_x).astype(jnp.float32), n_pad)
    ehT = _pad_lanes(jnp.transpose(p_0).astype(jnp.float32), n_pad)
    out = pl.pallas_call(
        functools.partial(_ctime_disc_loss_kernel, K=float(K),
                          beta1=float(beta1), n_rows=float(N)),
        grid=(n_pad // tile,),
        in_specs=[
            pl.BlockSpec((1, tile), lambda i: (0, i)),
            pl.BlockSpec((K, tile), lambda i: (0, i)),
            pl.BlockSpec((K, tile), lambda i: (0, i)),
        ],
        out_specs=pl.BlockSpec((1, 1), lambda i: (0, 0)),
        out_shape=jax.ShapeDtypeStruct((1, 1), jnp.float32),
        scratch_shapes=[pltpu.VMEM((1, 1), jnp.float32)],
        compiler_params=pltpu.CompilerParams(
            dimension_semantics=("arbitrary",), vmem_limit_bytes=_VMEM_LIMIT),
    )(t_row, exT, ehT)
    return out[0, 0]


# ----------------------------------------------------------------------------
# discretised_cdf
#   f = 0.5 * (1 + erf((x - mu) / (sigma * sqrt(2)))), clamped to {0,1} at |x|>=1
# mu/sigma are read once per row tile ([D, N] lane-dense blocks); the BINS bin
# boundaries live in SMEM and are broadcast in-kernel (no HBM broadcast).
# ----------------------------------------------------------------------------
def _disc_cdf_kernel(xb_ref, mu_ref, sg_ref, f_ref, *, n_bins):
    mu = mu_ref[...]                                               # [D, tile]
    inv = pl.reciprocal(sg_ref[...] * math.sqrt(2.0))
    for b in range(n_bins):                                        # static unroll
        xb = xb_ref[b]
        f = 0.5 * (1.0 + jax.lax.erf((xb - mu) * inv))
        xb_v = jnp.full_like(f, xb)
        f = jnp.where(xb_v >= 1.0, jnp.ones_like(f), f)
        f = jnp.where(xb_v <= -1.0, jnp.zeros_like(f), f)
        f_ref[b, :, :] = f


def discretised_cdf(mu, sigma, x, max_tile=1024):
    """mu, sigma: [N, D].  x: bin boundaries broadcastable against [N, 1, D]
    and constant over N and D (the module's use case: k_l/k_c/k_r values).
    Returns the [N, BINS, D] cdf tensor."""
    N, D = mu.shape
    x_vals = jnp.reshape(jnp.asarray(x, jnp.float32), (-1,))       # [BINS]
    bins = x_vals.shape[0]
    tile, n_pad = _lane_tiling(N, max_tile)
    muT = _pad_lanes(jnp.transpose(mu).astype(jnp.float32), n_pad)
    sgT = _pad_lanes(jnp.transpose(sigma).astype(jnp.float32), n_pad, value=1.0)
    out = pl.pallas_call(
        functools.partial(_disc_cdf_kernel, n_bins=bins),
        grid=(n_pad // tile,),
        in_specs=[
            pl.BlockSpec(memory_space=_SMEM),                      # bin values
            pl.BlockSpec((D, tile), lambda i: (0, i)),             # mu^T
            pl.BlockSpec((D, tile), lambda i: (0, i)),             # sigma^T
        ],
        out_specs=pl.BlockSpec((bins, D, tile), lambda i: (0, 0, i)),
        out_shape=jax.ShapeDtypeStruct((bins, D, n_pad), jnp.float32),
        compiler_params=pltpu.CompilerParams(
            dimension_semantics=("parallel",), vmem_limit_bytes=_VMEM_LIMIT),
    )(x_vals, muT, sgT)
    return jnp.transpose(out[:, :, :N], (2, 0, 1))                 # [N, BINS, D]


# ----------------------------------------------------------------------------
# zero_center_of_mass (scatter_mean), two tiled passes:
#   pass 1: one MXU matmul per row tile accumulates per-segment sums AND counts
#           (ones row appended to x^T), bf16 one-hot halves HBM traffic.
#   pass 2: gather each row's segment mean with a tiny canonical matmul and
#           subtract — lane-dense [D, N] output.
# Counts are clamped to >= 1 (empty segments can no longer poison the output).
# ----------------------------------------------------------------------------
def _seg_sum_kernel(ohT_ref, xaT_ref, out_ref, acc_ref):
    @pl.when(pl.program_id(0) == 0)
    def _():
        acc_ref[...] = jnp.zeros_like(acc_ref)

    oh = ohT_ref[...].astype(jnp.float32)                          # [S, tile]
    acc_ref[...] += jnp.einsum('sn,dn->sd', oh, xaT_ref[...],
                               preferred_element_type=jnp.float32)  # [S, D+1]

    @pl.when(pl.program_id(0) == pl.num_programs(0) - 1)
    def _():
        out_ref[...] = acc_ref[...]


def _seg_center_kernel(ohT_ref, xT_ref, meansT_ref, out_ref):
    oh = ohT_ref[...].astype(jnp.float32)                          # [S, tile]
    out_ref[...] = xT_ref[...] - jnp.dot(meansT_ref[...], oh,
                                         preferred_element_type=jnp.float32)


def zero_center_of_mass(x_pos, segment_ids, num_segments, max_tile=1024):
    N, D = x_pos.shape
    S = int(num_segments)
    tile, n_pad = _lane_tiling(N, max_tile)
    xT = _pad_lanes(jnp.transpose(x_pos).astype(jnp.float32), n_pad)
    xaT = jnp.concatenate([xT, jnp.ones((1, n_pad), jnp.float32)], axis=0)
    ohT = _pad_lanes(
        jnp.transpose(jax.nn.one_hot(segment_ids, S, dtype=jnp.bfloat16)), n_pad)
    grid = (n_pad // tile,)

    acc = pl.pallas_call(
        _seg_sum_kernel,
        grid=grid,
        in_specs=[
            pl.BlockSpec((S, tile), lambda i: (0, i)),             # one-hot^T
            pl.BlockSpec((D + 1, tile), lambda i: (0, i)),         # [x; 1]^T
        ],
        out_specs=pl.BlockSpec((S, D + 1), lambda i: (0, 0)),
        out_shape=jax.ShapeDtypeStruct((S, D + 1), jnp.float32),
        scratch_shapes=[pltpu.VMEM((S, D + 1), jnp.float32)],
        compiler_params=pltpu.CompilerParams(
            dimension_semantics=("arbitrary",), vmem_limit_bytes=_VMEM_LIMIT),
    )(ohT, xaT)
    sums, counts = acc[:, :D], acc[:, D:D + 1]
    meansT = jnp.transpose(sums / jnp.maximum(counts, 1.0))        # [D, S]

    outT = pl.pallas_call(
        _seg_center_kernel,
        grid=grid,
        in_specs=[
            pl.BlockSpec((S, tile), lambda i: (0, i)),
            pl.BlockSpec((D, tile), lambda i: (0, i)),
            pl.BlockSpec((D, S), lambda i: (0, 0)),                # resident
        ],
        out_specs=pl.BlockSpec((D, tile), lambda i: (0, i)),
        out_shape=jax.ShapeDtypeStruct((D, n_pad), jnp.float32),
        compiler_params=pltpu.CompilerParams(
            dimension_semantics=("parallel",), vmem_limit_bytes=_VMEM_LIMIT),
    )(ohT, xT, meansT)
    return jnp.transpose(outT[:, :N])


# TODO(synk): dtime4discrete_loss / dtime4discrete_loss_prob use Monte-Carlo
# sampling from a MixtureSameFamily distribution, and dtime4circular_loss /
# ctime4circular_loss use i0e/i1e Bessel weights; they are not a single
# rectangular hot path and are left in plain-JAX territory (not Pallas here).
# dtime4continuous_loss(_cir) is a simple weighted MSE, also left to XLA.


# ----------------------------------------------------------------------------
# main
# ----------------------------------------------------------------------------
def _check(name, got, want, atol=1e-4, rtol=1e-4):
    got = jnp.asarray(got)
    want = jnp.asarray(want)
    if got.shape != want.shape:
        raise AssertionError(f"{name} shape mismatch: {got.shape} vs {want.shape}")
    if not jnp.allclose(got, want, atol=atol, rtol=rtol):
        raise AssertionError(f"{name} mismatch: max abs err "
                             f"{float(jnp.max(jnp.abs(got - want)))}")


if __name__ == "__main__":
    key = jax.random.PRNGKey(0)
    # nodes x 3-D coords, K discrete classes, S graph segments, BINS bins.
    N, D, K, S, BINS = 200, 3, 16, 8, 9         # N=200 exercises lane padding
    sigma1 = 0.001
    beta1 = 1.5

    ks = jax.random.split(key, 10)
    x_pos = jax.random.normal(ks[0], (N, D), jnp.float32)
    segment_ids = jax.random.randint(ks[1], (N,), 0, S)
    t = jax.random.uniform(ks[2], (N, 1), jnp.float32, minval=0.05, maxval=0.95)
    eps_c = jax.random.normal(ks[3], (N, D), jnp.float32)
    x_disc = jax.nn.one_hot(jax.random.randint(ks[4], (N,), 0, K), K,
                            dtype=jnp.float32)
    eps_d = jax.random.normal(ks[5], (N, K), jnp.float32)
    x_pred = jax.random.normal(ks[6], (N, D), jnp.float32)
    p_0 = jax.nn.softmax(jax.random.normal(ks[7], (N, K), jnp.float32), axis=-1)
    mu_in = jax.random.normal(ks[8], (N, D), jnp.float32)
    sigma_in = jnp.abs(jax.random.normal(ks[9], (N, D), jnp.float32)) + 0.1

    # --- continuous_var_bayesian_flow --------------------------------------
    mu, gamma = continuous_var_bayesian_flow(t, sigma1, x_pos, eps_c)
    gamma_ref = 1.0 - jnp.power(sigma1, 2.0 * t)
    mu_ref = gamma_ref * x_pos + eps_c * jnp.sqrt(gamma_ref * (1.0 - gamma_ref))
    _check("continuous_var_bayesian_flow.mu", mu, mu_ref)
    _check("continuous_var_bayesian_flow.gamma", gamma, gamma_ref)

    # --- discrete_var_bayesian_flow -----------------------------------------
    theta = discrete_var_bayesian_flow(t, beta1, x_disc, K, eps_d)
    beta = beta1 * t ** 2
    y_ref = beta * (K * x_disc - 1.0) + jnp.sqrt(beta * K) * eps_d
    theta_ref = jax.nn.softmax(y_ref, axis=-1)
    _check("discrete_var_bayesian_flow", theta, theta_ref)

    # --- ctime4continuous_loss ----------------------------------------------
    loss_c = ctime4continuous_loss(t, sigma1, x_pred, x_pos)
    lref = (-jnp.log(sigma1)
            * jnp.sum((x_pred - x_pos) ** 2, axis=1)
            * jnp.power(sigma1, -2.0 * t.reshape(-1)))
    _check("ctime4continuous_loss", loss_c, lref)

    # --- ctime4discrete_loss ------------------------------------------------
    loss_d = ctime4discrete_loss(t, beta1, x_disc, p_0, K)
    ldref = jnp.mean(K * beta1 * t.reshape(-1)
                     * jnp.sum((x_disc - p_0) ** 2, axis=-1))
    _check("ctime4discrete_loss", loss_d, ldref)

    # --- discretised_cdf (both lower and upper bin edges) --------------------
    _, k_l, k_r = get_k_params(BINS)
    cdfs = []
    for name, edges in (("k_l", k_l), ("k_r", k_r)):
        x_bins = jnp.asarray(edges, jnp.float32).reshape(1, BINS, 1)
        cdf = discretised_cdf(mu_in, sigma_in, x_bins)
        f_ref = 0.5 * (1.0 + jax.scipy.special.erf(
            (x_bins - mu_in[:, None, :]) / (sigma_in[:, None, :] * math.sqrt(2.0))))
        f_ref = jnp.where(x_bins >= 1.0, jnp.ones_like(f_ref), f_ref)
        f_ref = jnp.where(x_bins <= -1.0, jnp.zeros_like(f_ref), f_ref)
        _check(f"discretised_cdf[{name}]", cdf, f_ref)
        cdfs.append(cdf)

    # --- zero_center_of_mass --------------------------------------------------
    com = zero_center_of_mass(x_pos, segment_ids, S)
    seg_sum = jax.ops.segment_sum(x_pos, segment_ids, num_segments=S)
    seg_cnt = jax.ops.segment_sum(jnp.ones((N, 1), jnp.float32), segment_ids,
                                  num_segments=S)
    com_ref = x_pos - (seg_sum / jnp.maximum(seg_cnt, 1.0))[segment_ids]
    _check("zero_center_of_mass", com, com_ref)

    jax.block_until_ready((mu, gamma, theta, loss_c, loss_d, com, *cdfs))
    print("KERNEL_OK")
</pallas_src>

<mosaic_0001>
module attributes {stable_mosaic.version = 11 : i64} {
  func.func @_cont_flow_kernel(%arg0: i32, %arg1: memref<1x256xf32, #tpu.memory_space<vmem>>, %arg2: memref<3x256xf32, #tpu.memory_space<vmem>>, %arg3: memref<3x256xf32, #tpu.memory_space<vmem>>, %arg4: memref<3x256xf32, #tpu.memory_space<vmem>>, %arg5: memref<1x256xf32, #tpu.memory_space<vmem>>) attributes {dimension_semantics = [#tpu.dimension_semantics<parallel>], iteration_bounds = array<i64: 1>, scalar_prefetch = 0 : i64, scratch_operands = 0 : i64, tpu.core_type = #tpu.core_type<tc>, window_params = [{transform_indices = @transform_0, window_bounds = array<i64: 1, 256>}, {transform_indices = @transform_1, window_bounds = array<i64: 3, 256>}, {transform_indices = @transform_2, window_bounds = array<i64: 3, 256>}, {transform_indices = @transform_3, window_bounds = array<i64: 3, 256>}, {transform_indices = @transform_4, window_bounds = array<i64: 1, 256>}]} {
    %c0 = arith.constant 0 : index
    %c0_0 = arith.constant 0 : index
    %0 = vector.load %arg1[%c0, %c0_0] : memref<1x256xf32, #tpu.memory_space<vmem>>, vector<1x256xf32>
    %cst = arith.constant -13.8155107 : f32
    %1 = vector.broadcast %cst : f32 to vector<1x256xf32>
    %2 = arith.mulf %1, %0 : vector<1x256xf32>
    %3 = math.exp %2 : vector<1x256xf32>
    %cst_1 = arith.constant 1.000000e+00 : f32
    %4 = vector.broadcast %cst_1 : f32 to vector<1x256xf32>
    %5 = arith.subf %4, %3 : vector<1x256xf32>
    %c0_2 = arith.constant 0 : index
    %c0_3 = arith.constant 0 : index
    %6 = vector.load %arg2[%c0_2, %c0_3] : memref<3x256xf32, #tpu.memory_space<vmem>>, vector<3x256xf32>
    %7 = vector.broadcast %5 : vector<1x256xf32> to vector<3x256xf32>
    %8 = arith.mulf %7, %6 : vector<3x256xf32>
    %c0_4 = arith.constant 0 : index
    %c0_5 = arith.constant 0 : index
    %9 = vector.load %arg3[%c0_4, %c0_5] : memref<3x256xf32, #tpu.memory_space<vmem>>, vector<3x256xf32>
    %cst_6 = arith.constant 1.000000e+00 : f32
    %10 = vector.broadcast %cst_6 : f32 to vector<1x256xf32>
    %11 = arith.subf %10, %5 : vector<1x256xf32>
    %12 = arith.mulf %5, %11 : vector<1x256xf32>
    %13 = math.sqrt %12 : vector<1x256xf32>
    %14 = vector.broadcast %13 : vector<1x256xf32> to vector<3x256xf32>
    %15 = arith.mulf %9, %14 : vector<3x256xf32>
    %16 = arith.addf %8, %15 : vector<3x256xf32>
    %c0_7 = arith.constant 0 : index
    %c0_8 = arith.constant 0 : index
    %17 = vector.load %arg4[%c0_7, %c0_8] : memref<3x256xf32, #tpu.memory_space<vmem>>, vector<3x256xf32>
    tpu.vector_store %arg4[%c0_7, %c0_8], %16 {strides = array<i32>} : memref<3x256xf32, #tpu.memory_space<vmem>>, vector<3x256xf32>,
    %c0_9 = arith.constant 0 : index
    %c0_10 = arith.constant 0 : index
    %18 = vector.load %arg5[%c0_9, %c0_10] : memref<1x256xf32, #tpu.memory_space<vmem>>, vector<1x256xf32>
    tpu.vector_store %arg5[%c0_9, %c0_10], %5 {strides = array<i32>} : memref<1x256xf32, #tpu.memory_space<vmem>>, vector<1x256xf32>,
    return
  }
  func.func @transform_0(%arg0: i32) -> (i32, i32) {
    %c0_i32 = arith.constant 0 : i32
    %c0_i32_0 = arith.constant 0 : i32
    return %c0_i32, %arg0 : i32, i32
  }
  func.func @transform_1(%arg0: i32) -> (i32, i32) {
    %c0_i32 = arith.constant 0 : i32
    %c0_i32_0 = arith.constant 0 : i32
    return %c0_i32, %arg0 : i32, i32
  }
  func.func @transform_2(%arg0: i32) -> (i32, i32) {
    %c0_i32 = arith.constant 0 : i32
    %c0_i32_0 = arith.constant 0 : i32
    return %c0_i32, %arg0 : i32, i32
  }
  func.func @transform_3(%arg0: i32) -> (i32, i32) {
    %c0_i32 = arith.constant 0 : i32
    %c0_i32_0 = arith.constant 0 : i32
    return %c0_i32, %arg0 : i32, i32
  }
  func.func @transform_4(%arg0: i32) -> (i32, i32) {
    %c0_i32 = arith.constant 0 : i32
    %c0_i32_0 = arith.constant 0 : i32
    return %c0_i32, %arg0 : i32, i32
  }
}

</mosaic_0001>

<llo_original>
// kernel: tpu_custom_call.1
$region0: #{tpu_custom_call.1}
  #allocation0 [shape = 'u32[]', space=smem, size = 0x4, offset = 0x4, fixed_abs, tag = 'smem constant byte address 0x4 - core index']
  #allocation1 [shape = 'u32[144,128]{1,0:T(1,128)}', space=vmem, size = 0x12000, scoped, tag = 'internal scratch']
  %s0 = inlined_call_operand.hbm [shape: f32[1,256], index: 0, kind: input, shape index: {}]
  %s1 = inlined_call_operand.hbm [shape: f32[3,256], index: 1, kind: input, shape index: {}]
  %s2 = inlined_call_operand.hbm [shape: f32[3,256], index: 2, kind: input, shape index: {}]
  %s3 = inlined_call_operand.hbm [shape: f32[3,256], index: 3, kind: output, shape index: {0}]
  %s4 = inlined_call_operand.hbm [shape: f32[1,256], index: 4, kind: output, shape index: {1}]
  %5 = xla_tuple %s3, %s4
  %s6 = sld [smem:[#allocation0]]
  $region42: #{tpu_custom_call.1} parent=0
    _
  %s8 = ssub.s32 1, %s6
  %s9 = scalar_select 0, %s8, %s6
  $region1: #{tpu_custom_call.1} parent=0
    #allocation2 [shape = 'u8[1024]{0}', space=vmem, size = 0x400, scoped, tag = 'input window, operand 0, single buffered']
    #allocation3 [shape = 's32[1]{0}', space=sflag, size = 0x4, scoped, tag = 'scoped memory for tpu_custom_call.1']
    #allocation4 [shape = 's32[1]{0}', space=sflag, size = 0x4, scoped, tag = 'scoped memory for tpu_custom_call.1']
    #allocation5 [shape = 'u8[4096]{0}', space=vmem, size = 0x1000, scoped, tag = 'input window, operand 1, single buffered']
    #allocation6 [shape = 's32[1]{0}', space=sflag, size = 0x4, scoped, tag = 'scoped memory for tpu_custom_call.1']
    #allocation7 [shape = 'u8[4096]{0}', space=vmem, size = 0x1000, scoped, tag = 'input window, operand 2, single buffered']
    #allocation8 [shape = 'u8[4096]{0}', space=vmem, size = 0x1000, scoped, tag = 'output window, operand 0, single buffered']
    #allocation9 [shape = 'u8[1024]{0}', space=vmem, size = 0x400, scoped, tag = 'output window, operand 1, single buffered']
    #allocation10 [shape = 's32[1]{0}', space=sflag, size = 0x4, scoped, tag = 'scoped memory for tpu_custom_call.1']
    %10 = vsyncpa [#allocation3], 0
    %11 = vsyncpa [#allocation6], 0
    %12 = vsyncpa [#allocation4], 0
    %13 = vsyncpa [#allocation10], 0
    // Predicated region
    $region2: #{tpu_custom_call.1} parent=1 // pred_check
      _
    $region3: #{tpu_custom_call.1} parent=1 // pred_check_branch
      %15 = sbr.rel (0) target = $region5
    $region4: #{tpu_custom_call.1} parent=1 // pred_region
      %s17 = ssub.s32 32, 32
      %18 = vsyncadd [#allocation3], %s17
      %s20 = sshll.u32 [#allocation2], 4
      %s21 = int_to_ptr.vmem [resolvable:$true] %s20
      %23 = dma.hbm_to_vmem [thread:$0]  %s0, 32, %s21, [#allocation3]
    $region5: #{tpu_custom_call.1} parent=1 // pred_fallthru
      _
    // Predicated region
    $region6: #{tpu_custom_call.1} parent=1 // pred_check
      _
    $region7: #{tpu_custom_call.1} parent=1 // pred_check_branch
      %25 = sbr.rel (0) target = $region9
    $region8: #{tpu_custom_call.1} parent=1 // pred_region
      %s27 = ssub.s32 128, 128
      %28 = vsyncadd [#allocation6], %s27
      %s30 = sshll.u32 [#allocation5], 4
      %s31 = int_to_ptr.vmem [resolvable:$true] %s30
      %33 = dma.hbm_to_vmem [thread:$0]  %s1, 128, %s31, [#allocation6]
    $region9: #{tpu_custom_call.1} parent=1 // pred_fallthru
      _
    // Predicated region
    $region10: #{tpu_custom_call.1} parent=1 // pred_check
      _
    $region11: #{tpu_custom_call.1} parent=1 // pred_check_branch
      %35 = sbr.rel (0) target = $region13
    $region12: #{tpu_custom_call.1} parent=1 // pred_region
      %s37 = ssub.s32 128, 128
      %38 = vsyncadd [#allocation6], %s37
      %s40 = sshll.u32 [#allocation7], 4
      %s41 = int_to_ptr.vmem [resolvable:$true] %s40
      %43 = dma.hbm_to_vmem [thread:$0]  %s2, 128, %s41, [#allocation6]
    $region13: #{tpu_custom_call.1} parent=1 // pred_fallthru
      _
    // Predicated region
    $region14: #{tpu_custom_call.1} parent=1 // pred_check
      _
    $region15: #{tpu_custom_call.1} parent=1 // pred_check_branch
      %45 = sbr.rel (0) target = $region17
    $region16: #{tpu_custom_call.1} parent=1 // pred_region
      %46 = dma.done [#allocation3], 32
    $region17: #{tpu_custom_call.1} parent=1 // pred_fallthru
      _
    // Predicated region
    $region18: #{tpu_custom_call.1} parent=1 // pred_check
      _
    $region19: #{tpu_custom_call.1} parent=1 // pred_check_branch
      %48 = sbr.rel (0) target = $region21
    $region20: #{tpu_custom_call.1} parent=1 // pred_region
      %49 = dma.done [#allocation6], 128
    $region21: #{tpu_custom_call.1} parent=1 // pred_fallthru
      _
    // Predicated region
    $region22: #{tpu_custom_call.1} parent=1 // pred_check
      _
    $region23: #{tpu_custom_call.1} parent=1 // pred_check_branch
      %51 = sbr.rel (0) target = $region25
    $region24: #{tpu_custom_call.1} parent=1 // pred_region
      %52 = dma.done [#allocation6], 128
    $region25: #{tpu_custom_call.1} parent=1 // pred_fallthru
      _
    %v53 = vld [vmem:[#allocation2] sm:$0x3]
    %v54 = vmul.f32 %v53, -13.815511
    %v55 = vmul.f32 %v54, 1.442695
    %v56 = vpow.pop %v55
    %v57 = vsub.f32 1.0, %v56
    %v58 = vld [vmem:[#allocation5] sm:$0x77]
    %v60 = vlaneseq
    %v61 = vshrl.u32 %v60, 7
    %v62 = vsub.s32 0, %v61
    %v63 = vrot.slane %v57, %v62
    %v64 = vlaneseq
    %v65 = vshrl.u32 %v64, 7
    %v66 = vsub.s32 1, %v65
    %v67 = vrot.slane %v57, %v66
    %v71 = vcombine.high %v58, %v58
    %v73 = vmul.f32 %v63, %v58
    %v74 = vmul.f32 %v67, %v71
    %v75 = vld [vmem:[#allocation7] sm:$0x77]
    %v76 = vsub.f32 1.0, %v57
    %v77 = vmul.f32 %v57, %v76
    %v78 = vrsqrt.pop %v77
    %v79 = vmul.f32 %v77, %v78
    %vm80 = vcmp.eq.f32.partialorder %v77, inf
    %v81 = vsel %vm80, %v77, %v79
    %vm82 = vcmp.eq.f32.partialorder %v77, 0.0
    %v83 = vand.u32 %v77, 2147483648
    %v84 = vsel %vm82, %v83, %v81
    %v86 = vlaneseq
    %v87 = vshrl.u32 %v86, 7
    %v88 = vsub.s32 0, %v87
    %v89 = vrot.slane %v84, %v88
    %v90 = vlaneseq
    %v91 = vshrl.u32 %v90, 7
    %v92 = vsub.s32 1, %v91
    %v93 = vrot.slane %v84, %v92
    %v94 = vcombine.low %v89, %v93
    %v96 = vmul.f32 %v75, %v94
    %v98 = vcombine.high %v96, %v96
    %v100 = vadd.f32 %v73, %v96
    %v101 = vadd.f32 %v74, %v98
    %v104 = vcombine.low %v100, %v101
    %106 = vst [vmem:[#allocation8] sm:$0x77] %v104
    %v107 = vlaneseq
    %vm108 = vcmp.ge.s32.totalorder %v107, 0
    %vm109 = vcmp.lt.s32.totalorder %v107, 256
    %vm110 = vmand %vm108, %vm109
    %111 = vst.msk [vmem:[#allocation9] sm:$0x3] %vm110, %v57
    // Predicated region
    $region26: #{tpu_custom_call.1} parent=1 // pred_check
      _
    $region27: #{tpu_custom_call.1} parent=1 // pred_check_branch
      %113 = sbr.rel (0) target = $region29
    $region28: #{tpu_custom_call.1} parent=1 // pred_region
      %s115 = ssub.s32 128, 128
      %116 = vsyncadd [#allocation4], %s115
      %s118 = sshll.u32 [#allocation8], 4
      %s119 = int_to_ptr.vmem [resolvable:$true] %s118
      %121 = dma.vmem_to_hbm [thread:$0]  %s119, 128, %s3, [#allocation4]
    $region29: #{tpu_custom_call.1} parent=1 // pred_fallthru
      _
    // Predicated region
    $region30: #{tpu_custom_call.1} parent=1 // pred_check
      _
    $region31: #{tpu_custom_call.1} parent=1 // pred_check_branch
      %123 = sbr.rel (0) target = $region33
    $region32: #{tpu_custom_call.1} parent=1 // pred_region
      %s125 = ssub.s32 32, 32
      %126 = vsyncadd [#allocation10], %s125
      %s128 = sshll.u32 [#allocation9], 4
      %s129 = int_to_ptr.vmem [resolvable:$true] %s128
      %131 = dma.vmem_to_hbm [thread:$0]  %s129, 32, %s4, [#allocation10]
    $region33: #{tpu_custom_call.1} parent=1 // pred_fallthru
      _
    // Predicated region
    $region34: #{tpu_custom_call.1} parent=1 // pred_check
      _
    $region35: #{tpu_custom_call.1} parent=1 // pred_check_branch
      %133 = sbr.rel (0) target = $region37
    $region36: #{tpu_custom_call.1} parent=1 // pred_region
      %134 = dma.done [#allocation4], 128
    $region37: #{tpu_custom_call.1} parent=1 // pred_fallthru
      _
    // Predicated region
    $region38: #{tpu_custom_call.1} parent=1 // pred_check
      _
    $region39: #{tpu_custom_call.1} parent=1 // pred_check_branch
      %136 = sbr.rel (0) target = $region41
    $region40: #{tpu_custom_call.1} parent=1 // pred_region
      %137 = dma.done [#allocation10], 32
    $region41: #{tpu_custom_call.1} parent=1 // pred_fallthru
      _
    %138 = vsyncpa [#allocation3], 1
    %139 = vsyncpa [#allocation6], 1
    %140 = vsyncpa [#allocation4], 1
    %141 = vsyncpa [#allocation10], 1

</llo_original>
